<compile_context>
chip_gen: v7x
topology: tpu7x:2x2x1
jax: 0.10.0
libtpu: 0.0.40
codegen_flags: <defaults>
</compile_context>

<pallas_src>
import jax
import jax.numpy as jnp
from jax import lax
from jax.experimental import pallas as pl
from jax.experimental.pallas import tpu as pltpu

_EPS = 1e-6
_COLS = 128
_TARGET_BLOCK_BYTES = 4 << 20   # ~4 MiB per input block per grid step


def _detect_num_tensorcores():
    """2 on dual-TensorCore chips (v7x), else 1; conservative on any failure."""
    try:
        kind = jax.devices()[0].device_kind.lower()
        if "v7" in kind or "7x" in kind:
            return 2
    except Exception:
        pass
    return 1


def _detect_vmem_cap_bytes():
    try:
        return int(pltpu.get_tpu_info().vmem_capacity_bytes)
    except Exception:
        return 64 << 20   # v7x per-TC VMEM; conservative default


def _make_loglik_kernel(valid_rows, needs_mask):
    def kernel(x_ref, xh_ref, o_ref):
        # o_ref is this core's (8, 128) f32 partial-sum block; it stays
        # resident in VMEM across the inner (reduction) grid axis.
        @pl.when(pl.program_id(1) == 0)
        def _():
            o_ref[...] = jnp.zeros_like(o_ref)

        x = x_ref[...].astype(jnp.float32)
        xh = xh_ref[...].astype(jnp.float32)
        xh = jnp.clip(xh, _EPS, 1.0 - _EPS)   # deliberate: keeps log() finite
        ll = x * jnp.log(xh) + (1.0 - x) * jnp.log1p(-xh)

        if needs_mask:
            # Zero out rows past the true extent (boundary-block overhang);
            # cheap VPU iota+select, hidden under the DMA of the next block.
            tr = ll.shape[0]
            row_start = (pl.program_id(0) * pl.num_programs(1)
                         + pl.program_id(1)) * tr
            row_ids = row_start + lax.broadcasted_iota(jnp.int32, ll.shape, 0)
            ll = jnp.where(row_ids < valid_rows, ll, 0.0)

        # Vreg-shaped accumulation: fold sublane groups of 8 with elementwise
        # VPU adds only; the cross-lane reduce is deferred to the wrapper.
        tr = ll.shape[0]
        o_ref[...] += ll.reshape(tr // 8, 8, _COLS).sum(axis=0)

    return kernel


def _plain_ll_sum(x, xh):
    x = x.astype(jnp.float32)
    xh = jnp.clip(xh.astype(jnp.float32), _EPS, 1.0 - _EPS)
    return jnp.sum(x * jnp.log(xh) + (1.0 - x) * jnp.log1p(-xh))


def log_likelihood(x, x_hat, scale=1.0, tile_rows_max=None):
    """mean(x*log(x_hat) + (1-x)*log(1-x_hat)) * scale as a Pallas TPU reduction."""
    assert x.shape == x_hat.shape
    total = int(x.size)
    cols = _COLS
    scale_over_n = jnp.float32(float(scale) / float(total))

    xf = x.reshape(-1)
    xhf = x_hat.reshape(-1)

    rows = total // cols
    tail = total - rows * cols

    if rows == 0:
        # Tiny input: kernel overhead isn't worth it.
        return _plain_ll_sum(xf, xhf) * scale_over_n

    tail_sum = jnp.float32(0.0)
    if tail:
        # Rare path: reduce the <128-element remainder in plain JAX and run
        # the kernel on the 128-aligned prefix (one prefix slice copy — far
        # cheaper than padding both full arrays, which tripled HBM traffic).
        tail_sum = _plain_ll_sum(xf[rows * cols:], xhf[rows * cols:])
        xf = xf[: rows * cols]
        xhf = xhf[: rows * cols]

    x2 = xf.reshape(rows, cols)
    xh2 = xhf.reshape(rows, cols)

    itemsize = max(x2.dtype.itemsize, xh2.dtype.itemsize)
    sub = max(8, 8 * (4 // itemsize))     # f32: 8, bf16: 16, 8-bit: 32 sublanes

    cores = _detect_num_tensorcores()     # 1 on v5e/v6e, 2 on v7x

    if tile_rows_max is None:
        tile_rows_max = max(sub, _TARGET_BLOCK_BYTES // (cols * itemsize))

    # Biggest block that still covers the input; aligned to the min sublane tile.
    tile_rows = min(int(tile_rows_max), max(sub, pl.cdiv(rows, cores)))
    tile_rows = pl.cdiv(tile_rows, sub) * sub
    inner_steps = pl.cdiv(rows, cores * tile_rows)
    padded_rows = cores * inner_steps * tile_rows
    needs_mask = padded_rows > rows       # static: compile mask only if needed

    kernel = _make_loglik_kernel(rows, needs_mask)

    def in_index_map(c, i):
        return (c * inner_steps + i, 0)

    # 2 inputs x 2 pipeline buffers + resident output + slack, capped by the
    # detected per-generation VMEM capacity (with headroom) instead of 32 MiB.
    in_bytes = tile_rows * cols * (x2.dtype.itemsize + xh2.dtype.itemsize)
    needed = 2 * in_bytes + cores * 8 * cols * 4 + (4 << 20)
    vmem_cap = (_detect_vmem_cap_bytes() * 3) // 4
    vmem_limit = int(min(max(needed, 16 << 20), vmem_cap))

    if cores > 1:
        lead_sem = getattr(pltpu, "CORE_PARALLEL", pltpu.PARALLEL)
    else:
        lead_sem = pltpu.PARALLEL
    dims = (lead_sem, pltpu.ARBITRARY)

    out = pl.pallas_call(
        kernel,
        out_shape=jax.ShapeDtypeStruct((cores * 8, cols), jnp.float32),
        grid_spec=pltpu.PrefetchScalarGridSpec(
            num_scalar_prefetch=0,
            grid=(cores, inner_steps),
            in_specs=[
                pl.BlockSpec((tile_rows, cols), in_index_map),
                pl.BlockSpec((tile_rows, cols), in_index_map),
            ],
            out_specs=pl.BlockSpec((8, cols), lambda c, i: (c, 0)),
        ),
        compiler_params=pltpu.CompilerParams(
            dimension_semantics=dims,
            vmem_limit_bytes=vmem_limit,
        ),
        cost_estimate=pl.CostEstimate(
            flops=5 * total,
            transcendentals=2 * total,
            bytes_accessed=total * (x2.dtype.itemsize + xh2.dtype.itemsize)
            + cores * 8 * cols * 4,
        ),
    )(x2, xh2)

    # Single tiny cross-lane reduce, outside the hot loop.
    total_sum = jnp.sum(out) + tail_sum
    return total_sum * scale_over_n


if __name__ == "__main__":
    key = jax.random.PRNGKey(0)

    def make_inputs(shape, k):
        k1, k2 = jax.random.split(k)
        x = jax.random.uniform(k1, shape, dtype=jnp.float32, minval=0.01, maxval=0.99)
        x_hat = jax.nn.sigmoid(jax.random.normal(k2, shape, dtype=jnp.float32))
        return x, x_hat

    def ref(x, x_hat, s=1.0):
        return jnp.mean(x * jnp.log(x_hat) + (1.0 - x) * jnp.log(1.0 - x_hat)) * s

    keys = jax.random.split(key, 3)

    # 1) Main path: NCHW input, numel % 128 == 0, no masking / no tail.
    x, xh = make_inputs((2, 4, 16, 16), keys[0])
    got = jax.block_until_ready(log_likelihood(x, xh, scale=1.0))
    want = ref(x, xh, 1.0)
    assert jnp.allclose(got, want, rtol=1e-5, atol=1e-6), (got, want)

    # 2) Row-overhang path: boundary block masked inside the kernel.
    x, xh = make_inputs((2, 5, 16, 16), keys[1])      # 2560 elems -> 20 rows
    got = jax.block_until_ready(log_likelihood(x, xh, scale=2.0, tile_rows_max=8))
    want = ref(x, xh, 2.0)
    assert jnp.allclose(got, want, rtol=1e-5, atol=1e-6), (got, want)

    # 3) Tail path: numel % 128 != 0 -> <128-element remainder in plain JAX.
    x, xh = make_inputs((2, 4, 10, 13), keys[2])      # 1040 = 8*128 + 16
    got = jax.block_until_ready(log_likelihood(x, xh, scale=1.0))
    want = ref(x, xh, 1.0)
    assert jnp.allclose(got, want, rtol=1e-5, atol=1e-6), (got, want)

    print("KERNEL_OK")
</pallas_src>

<mosaic_0001>
module attributes {stable_mosaic.version = 11 : i64} {
  func.func @kernel(%arg0: i32, %arg1: i32, %arg2: memref<16x128xf32, #tpu.memory_space<vmem>>, %arg3: memref<16x128xf32, #tpu.memory_space<vmem>>, %arg4: memref<8x128xf32, #tpu.memory_space<vmem>>) attributes {dimension_semantics = [#tpu.dimension_semantics<parallel>, #tpu.dimension_semantics<arbitrary>], iteration_bounds = array<i64: 1, 1>, scalar_prefetch = 0 : i64, scratch_operands = 0 : i64, tpu.core_type = #tpu.core_type<tc>, window_params = [{transform_indices = @transform_0, window_bounds = array<i64: 16, 128>}, {transform_indices = @transform_1, window_bounds = array<i64: 16, 128>}, {transform_indices = @transform_2, window_bounds = array<i64: 8, 128>}]} {
    %c0_i32 = arith.constant 0 : i32
    %0 = arith.cmpi eq, %arg1, %c0_i32 : i32
    %1 = arith.extui %0 : i1 to i32
    %c0_i32_0 = arith.constant 0 : i32
    %2 = arith.cmpi ne, %1, %c0_i32_0 : i32
    scf.if %2 {
      %cst_12 = arith.constant 0.000000e+00 : f32
      %23 = vector.broadcast %cst_12 : f32 to vector<8x128xf32>
      %c0_13 = arith.constant 0 : index
      %c0_14 = arith.constant 0 : index
      %24 = vector.load %arg4[%c0_13, %c0_14] : memref<8x128xf32, #tpu.memory_space<vmem>>, vector<8x128xf32>
      tpu.vector_store %arg4[%c0_13, %c0_14], %23 {strides = array<i32>} : memref<8x128xf32, #tpu.memory_space<vmem>>, vector<8x128xf32>,
    } else {
    }
    %c0 = arith.constant 0 : index
    %c0_1 = arith.constant 0 : index
    %3 = vector.load %arg2[%c0, %c0_1] : memref<16x128xf32, #tpu.memory_space<vmem>>, vector<16x128xf32>
    %c0_2 = arith.constant 0 : index
    %c0_3 = arith.constant 0 : index
    %4 = vector.load %arg3[%c0_2, %c0_3] : memref<16x128xf32, #tpu.memory_space<vmem>>, vector<16x128xf32>
    %cst = arith.constant 9.99999997E-7 : f32
    %cst_4 = arith.constant 0.999998986 : f32
    %5 = vector.broadcast %cst : f32 to vector<16x128xf32>
    %6 = arith.maximumf %5, %4 : vector<16x128xf32>
    %7 = vector.broadcast %cst_4 : f32 to vector<16x128xf32>
    %8 = arith.minimumf %7, %6 : vector<16x128xf32>
    %9 = math.log %8 : vector<16x128xf32>
    %10 = arith.mulf %3, %9 : vector<16x128xf32>
    %cst_5 = arith.constant 1.000000e+00 : f32
    %11 = vector.broadcast %cst_5 : f32 to vector<16x128xf32>
    %12 = arith.subf %11, %3 : vector<16x128xf32>
    %cst_6 = arith.constant 0.000000e+00 : f32
    %13 = vector.broadcast %cst_6 : f32 to vector<16x128xf32>
    %14 = arith.subf %13, %8 : vector<16x128xf32>
    %15 = math.log1p %14 : vector<16x128xf32>
    %16 = arith.mulf %12, %15 : vector<16x128xf32>
    %17 = arith.addf %10, %16 : vector<16x128xf32>
    %c0_7 = arith.constant 0 : index
    %c0_8 = arith.constant 0 : index
    %18 = vector.load %arg4[%c0_7, %c0_8] : memref<8x128xf32, #tpu.memory_space<vmem>>, vector<8x128xf32>
    %19 = vector.shape_cast %17 : vector<16x128xf32> to vector<2x8x128xf32>
    %cst_9 = arith.constant dense<0.000000e+00> : vector<8x128xf32>
    %20 = vector.multi_reduction <add>, %19, %cst_9 [0] : vector<2x8x128xf32> to vector<8x128xf32>
    %21 = arith.addf %18, %20 : vector<8x128xf32>
    %c0_10 = arith.constant 0 : index
    %c0_11 = arith.constant 0 : index
    %22 = vector.load %arg4[%c0_10, %c0_11] : memref<8x128xf32, #tpu.memory_space<vmem>>, vector<8x128xf32>
    tpu.vector_store %arg4[%c0_10, %c0_11], %21 {strides = array<i32>} : memref<8x128xf32, #tpu.memory_space<vmem>>, vector<8x128xf32>,
    return
  }
  func.func @transform_0(%arg0: i32, %arg1: i32) -> (i32, i32) {
    %c1_i32 = arith.constant 1 : i32
    %0 = arith.muli %arg0, %c1_i32 : i32
    %1 = arith.addi %0, %arg1 : i32
    %c0_i32 = arith.constant 0 : i32
    %c0_i32_0 = arith.constant 0 : i32
    return %1, %c0_i32 : i32, i32
  }
  func.func @transform_1(%arg0: i32, %arg1: i32) -> (i32, i32) {
    %c1_i32 = arith.constant 1 : i32
    %0 = arith.muli %arg0, %c1_i32 : i32
    %1 = arith.addi %0, %arg1 : i32
    %c0_i32 = arith.constant 0 : i32
    %c0_i32_0 = arith.constant 0 : i32
    return %1, %c0_i32 : i32, i32
  }
  func.func @transform_2(%arg0: i32, %arg1: i32) -> (i32, i32) {
    %c0_i32 = arith.constant 0 : i32
    %c0_i32_0 = arith.constant 0 : i32
    return %arg0, %c0_i32 : i32, i32
  }
}

</mosaic_0001>

<llo_original>
// kernel: tpu_custom_call.1
$region0: #{tpu_custom_call.1}
  #allocation0 [shape = 'u32[]', space=smem, size = 0x4, offset = 0x4, fixed_abs, tag = 'smem constant byte address 0x4 - core index']
  #allocation1 [shape = 'u32[144,128]{1,0:T(1,128)}', space=vmem, size = 0x12000, scoped, tag = 'internal scratch']
  %s0 = inlined_call_operand.hbm [shape: f32[16,128], index: 0, kind: input, shape index: {}]
  %s1 = inlined_call_operand.hbm [shape: f32[16,128], index: 1, kind: input, shape index: {}]
  %s2 = inlined_call_operand.hbm [shape: f32[8,128], index: 2, kind: output, shape index: {}]
  %s3 = sld [smem:[#allocation0]]
  $region30: #{tpu_custom_call.1} parent=0
    _
  %s5 = ssub.s32 1, %s3
  %s6 = scalar_select 0, %s5, %s3
  $region1: #{tpu_custom_call.1} parent=0
    #allocation2 [shape = 'u8[8192]{0}', space=vmem, size = 0x2000, scoped, tag = 'input window, operand 0, single buffered']
    #allocation3 [shape = 's32[1]{0}', space=sflag, size = 0x4, scoped, tag = 'scoped memory for tpu_custom_call.1']
    #allocation4 [shape = 's32[1]{0}', space=sflag, size = 0x4, scoped, tag = 'scoped memory for tpu_custom_call.1']
    #allocation5 [shape = 'u8[8192]{0}', space=vmem, size = 0x2000, scoped, tag = 'input window, operand 1, single buffered']
    #allocation6 [shape = 's32[1]{0}', space=sflag, size = 0x4, scoped, tag = 'scoped memory for tpu_custom_call.1']
    #allocation7 [shape = 'u8[4096]{0}', space=vmem, size = 0x1000, scoped, tag = 'output window, operand 0, single buffered']
    %7 = vsyncpa [#allocation3], 0
    %8 = vsyncpa [#allocation6], 0
    %9 = vsyncpa [#allocation4], 0
    // Predicated region
    $region2: #{tpu_custom_call.1} parent=1 // pred_check
      _
    $region3: #{tpu_custom_call.1} parent=1 // pred_check_branch
      %11 = sbr.rel (0) target = $region5
    $region4: #{tpu_custom_call.1} parent=1 // pred_region
      %s12 = sadd.s32 0, 0
      %s13 = smul.u32 2, %s12
      %s15 = ssub.s32 256, 256
      %16 = vsyncadd [#allocation3], %s15
      %s17 = smul.addr %s13, 128
      %s18 = scalar_lea.hbm %s0, %s17
      %s19 = sshll.u32 [#allocation2], 4
      %s20 = int_to_ptr.vmem [resolvable:$true] %s19
      %25 = dma.hbm_to_vmem [thread:$0]  %s18, 256, %s20, [#allocation3], 128, 128, 8
    $region5: #{tpu_custom_call.1} parent=1 // pred_fallthru
      _
    // Predicated region
    $region6: #{tpu_custom_call.1} parent=1 // pred_check
      _
    $region7: #{tpu_custom_call.1} parent=1 // pred_check_branch
      %27 = sbr.rel (0) target = $region9
    $region8: #{tpu_custom_call.1} parent=1 // pred_region
      %s28 = sadd.s32 0, 0
      %s29 = smul.u32 2, %s28
      %s31 = ssub.s32 256, 256
      %32 = vsyncadd [#allocation6], %s31
      %s33 = smul.addr %s29, 128
      %s34 = scalar_lea.hbm %s1, %s33
      %s35 = sshll.u32 [#allocation5], 4
      %s36 = int_to_ptr.vmem [resolvable:$true] %s35
      %41 = dma.hbm_to_vmem [thread:$0]  %s34, 256, %s36, [#allocation6], 128, 128, 8
    $region9: #{tpu_custom_call.1} parent=1 // pred_fallthru
      _
    // Predicated region
    $region10: #{tpu_custom_call.1} parent=1 // pred_check
      _
    $region11: #{tpu_custom_call.1} parent=1 // pred_check_branch
      %43 = sbr.rel (0) target = $region13
    $region12: #{tpu_custom_call.1} parent=1 // pred_region
      %44 = dma.done [#allocation3], 256
    $region13: #{tpu_custom_call.1} parent=1 // pred_fallthru
      _
    // Predicated region
    $region14: #{tpu_custom_call.1} parent=1 // pred_check
      _
    $region15: #{tpu_custom_call.1} parent=1 // pred_check_branch
      %46 = sbr.rel (0) target = $region17
    $region16: #{tpu_custom_call.1} parent=1 // pred_region
      %47 = dma.done [#allocation6], 256
    $region17: #{tpu_custom_call.1} parent=1 // pred_fallthru
      _
    %s48 = sadd.s32 0, 0
    %s49 = smul.u32 2, %s48
    %s50 = sadd.s32 0, 0
    %s51 = smul.u32 2, %s50
    %p52 = scmp.eq.s32.totalorder 0, 0
    // Predicated region
    $region18: #{tpu_custom_call.1} parent=1 // pred_check
      %p53 = pneg %p52
    $region19: #{tpu_custom_call.1} parent=1 // pred_check_branch
      %55 = sbr.rel (%p53) target = $region21
    $region20: #{tpu_custom_call.1} parent=1 // pred_region
      %56 = vst [vmem:[#allocation7] sm:$0xff] 0.0
    $region21: #{tpu_custom_call.1} parent=1 // pred_fallthru
      _
    %v57 = vld [vmem:[#allocation2] sm:$0xff]
    %v58 = vld [vmem:[#allocation2 + $0x8] sm:$0xff]
    %v59 = vld [vmem:[#allocation5] sm:$0xff]
    %v60 = vld [vmem:[#allocation5 + $0x8] sm:$0xff]
    %v61 = vmax.f32 %v59, 1e-06
    %v62 = vmax.f32 %v60, 1e-06
    %v63 = vmin.f32 %v61, 0.999999
    %v64 = vmin.f32 %v62, 0.999999
    %v65 = vlog2.pop %v63
    %v66 = vmul.f32 %v65, 0.6931472
    %v67 = vlog2.pop %v64
    %v68 = vmul.f32 %v67, 0.6931472
    %v69 = vmul.f32 %v57, %v66
    %v70 = vmul.f32 %v58, %v68
    %v71 = vsub.f32 1.0, %v57
    %v72 = vsub.f32 1.0, %v58
    %v73 = vsub.f32 0.0, %v63
    %v74 = vsub.f32 0.0, %v64
    %v75 = vadd.f32 %v73, 1.0
    %v76 = vlog2.pop %v75
    %v77 = vmul.f32 %v76, 0.6931472
    %v78 = vmul.f32 -0.5, %v73
    %v79 = vadd.f32 %v78, 1.0
    %v80 = vmul.f32 %v79, %v73
    %v81 = vand.u32 2147483647, %v73
    %vm82 = vcmp.lt.f32.partialorder %v81, 0.0004427343
    %v83 = vsel %vm82, %v80, %v77
    %v84 = vadd.f32 %v74, 1.0
    %v85 = vlog2.pop %v84
    %v86 = vmul.f32 %v85, 0.6931472
    %v87 = vmul.f32 -0.5, %v74
    %v88 = vadd.f32 %v87, 1.0
    %v89 = vmul.f32 %v88, %v74
    %v90 = vand.u32 2147483647, %v74
    %vm91 = vcmp.lt.f32.partialorder %v90, 0.0004427343
    %v92 = vsel %vm91, %v89, %v86
    %v93 = vmul.f32 %v71, %v83
    %v94 = vmul.f32 %v72, %v92
    %v95 = vadd.f32 %v69, %v93
    %v96 = vadd.f32 %v70, %v94
    %v97 = vld [vmem:[#allocation7] sm:$0xff]
    %v98 = vadd.f32 %v95, %v96
    %v99 = vadd.f32 %v97, %v98
    %100 = vst [vmem:[#allocation7] sm:$0xff] %v99
    // Predicated region
    $region22: #{tpu_custom_call.1} parent=1 // pred_check
      _
    $region23: #{tpu_custom_call.1} parent=1 // pred_check_branch
      %102 = sbr.rel (0) target = $region25
    $region24: #{tpu_custom_call.1} parent=1 // pred_region
      %s104 = ssub.s32 128, 128
      %105 = vsyncadd [#allocation4], %s104
      %s107 = sshll.u32 [#allocation7], 4
      %s108 = int_to_ptr.vmem [resolvable:$true] %s107
      %110 = dma.vmem_to_hbm [thread:$0]  %s108, 128, %s2, [#allocation4]
    $region25: #{tpu_custom_call.1} parent=1 // pred_fallthru
      _
    // Predicated region
    $region26: #{tpu_custom_call.1} parent=1 // pred_check
      _
    $region27: #{tpu_custom_call.1} parent=1 // pred_check_branch
      %112 = sbr.rel (0) target = $region29
    $region28: #{tpu_custom_call.1} parent=1 // pred_region
      %113 = dma.done [#allocation4], 128
    $region29: #{tpu_custom_call.1} parent=1 // pred_fallthru
      _
    %114 = vsyncpa [#allocation3], 1
    %115 = vsyncpa [#allocation6], 1
    %116 = vsyncpa [#allocation4], 1

</llo_original>
